<compile_context>
chip_gen: v5e
topology: v5e:2x2
jax: 0.10.0
libtpu: 0.0.40
codegen_flags: <defaults>
</compile_context>

<pallas_src>
import jax
import jax.numpy as jnp
from jax import lax
from jax.experimental import pallas as pl
from jax.experimental.pallas import tpu as pltpu


def _round_up(x: int, m: int) -> int:
    return ((x + m - 1) // m) * m


# ----------------------------- kernels ------------------------------------- #

def _noisy_linear_train_kernel(x_ref, wmu_ref, wsig_ref, eout_ref, ein_ref,
                               bmu_ref, bsig_ref, beps_ref, out_ref, acc_ref):
    k = pl.program_id(2)

    @pl.when(k == 0)
    def _():
        acc_ref[...] = jnp.zeros_like(acc_ref)

    # Per-tile factorized noise outer product (VPU work hidden under MXU/DMA):
    #   W_tile = mu + sigma * (eps_out ⊗ eps_in)
    w = wmu_ref[...] + wsig_ref[...] * (eout_ref[...] * ein_ref[...])  # (TN,TK)

    # y += x @ W.T  via contraction on dim 1 of both operands (no XLU transpose).
    acc_ref[...] += lax.dot_general(
        x_ref[...], w,
        dimension_numbers=(((1,), (1,)), ((), ())),
        preferred_element_type=jnp.float32)

    @pl.when(k == pl.num_programs(2) - 1)
    def _():
        b = bmu_ref[...] + bsig_ref[...] * beps_ref[...]          # (1, TN)
        out_ref[...] = (acc_ref[...] + b).astype(out_ref.dtype)


def _noisy_linear_eval_kernel(x_ref, wmu_ref, bmu_ref, out_ref, acc_ref):
    k = pl.program_id(2)

    @pl.when(k == 0)
    def _():
        acc_ref[...] = jnp.zeros_like(acc_ref)

    acc_ref[...] += lax.dot_general(
        x_ref[...], wmu_ref[...],
        dimension_numbers=(((1,), (1,)), ((), ())),
        preferred_element_type=jnp.float32)

    @pl.when(k == pl.num_programs(2) - 1)
    def _():
        out_ref[...] = (acc_ref[...] + bmu_ref[...]).astype(out_ref.dtype)


# ----------------------------- wrapper -------------------------------------- #

def noisy_linear_forward(x, weight_mu, weight_sigma, eps_in, eps_out,
                         bias_mu, bias_sigma, training: bool = True,
                         tm: int = 128, tn: int = 256, tk: int = 512):
    """Pallas implementation of NoisyLinear.forward.

    eps_in (in_features,) and eps_out (out_features,) are the factorized noise
    vectors; weight_epsilon = outer(eps_out, eps_in), bias_epsilon = eps_out.
    """
    B, in_f = x.shape
    out_f, in_f2 = weight_mu.shape
    assert in_f == in_f2

    # Tile sizes aligned to f32 vreg tiling (8 sublanes x 128 lanes), clamped
    # to the (padded) problem size. Modest tiles keep VMEM usage well under the
    # v7x 64 MiB / v5e scoped-limit budgets while still saturating DMA.
    TM = min(tm, _round_up(B, 8))
    TN = min(tn, _round_up(out_f, 128))
    TK = min(tk, _round_up(in_f, 128))

    Bp = _round_up(B, TM)
    Np = _round_up(out_f, TN)
    Kp = _round_up(in_f, TK)

    # Zero-padding is exact: padded weight rows/cols are 0, padded x cols hit
    # zero weight cols, padded outputs are sliced off below.
    xp = jnp.pad(x, ((0, Bp - B), (0, Kp - in_f)))
    wmu = jnp.pad(weight_mu, ((0, Np - out_f), (0, Kp - in_f)))
    bmu = jnp.pad(bias_mu, (0, Np - out_f)).reshape(1, Np)

    grid = (Bp // TM, Np // TN, Kp // TK)

    x_spec = pl.BlockSpec((TM, TK), lambda i, j, k: (i, k))
    w_spec = pl.BlockSpec((TN, TK), lambda i, j, k: (j, k))
    brow_spec = pl.BlockSpec((1, TN), lambda i, j, k: (0, j))
    out_spec = pl.BlockSpec((TM, TN), lambda i, j, k: (i, j))

    flops = 2 * Bp * Kp * Np
    cparams = pltpu.CompilerParams(
        dimension_semantics=("parallel", "parallel", "arbitrary"))

    if training:
        wsig = jnp.pad(weight_sigma, ((0, Np - out_f), (0, Kp - in_f)))
        eout_col = jnp.pad(eps_out, (0, Np - out_f)).reshape(Np, 1)
        ein_row = jnp.pad(eps_in, (0, Kp - in_f)).reshape(1, Kp)
        bsig = jnp.pad(bias_sigma, (0, Np - out_f)).reshape(1, Np)
        beps = jnp.pad(eps_out, (0, Np - out_f)).reshape(1, Np)

        bytes_accessed = 4 * (xp.size + 2 * wmu.size + Bp * Np
                              + eout_col.size + ein_row.size + 3 * Np)
        out_p = pl.pallas_call(
            _noisy_linear_train_kernel,
            out_shape=jax.ShapeDtypeStruct((Bp, Np), x.dtype),
            grid_spec=pltpu.PrefetchScalarGridSpec(
                num_scalar_prefetch=0,
                grid=grid,
                in_specs=[
                    x_spec,                                         # x
                    w_spec,                                         # weight_mu
                    w_spec,                                         # weight_sigma
                    pl.BlockSpec((TN, 1), lambda i, j, k: (j, 0)),  # eps_out col
                    pl.BlockSpec((1, TK), lambda i, j, k: (0, k)),  # eps_in row
                    brow_spec,                                      # bias_mu
                    brow_spec,                                      # bias_sigma
                    brow_spec,                                      # bias_epsilon
                ],
                out_specs=out_spec,
                scratch_shapes=[pltpu.VMEM((TM, TN), jnp.float32)]),
            compiler_params=cparams,
            cost_estimate=pl.CostEstimate(flops=flops, transcendentals=0,
                                          bytes_accessed=bytes_accessed),
        )(xp, wmu, wsig, eout_col, ein_row, bmu, bsig, beps)
    else:
        bytes_accessed = 4 * (xp.size + wmu.size + Bp * Np + Np)
        out_p = pl.pallas_call(
            _noisy_linear_eval_kernel,
            out_shape=jax.ShapeDtypeStruct((Bp, Np), x.dtype),
            grid_spec=pltpu.PrefetchScalarGridSpec(
                num_scalar_prefetch=0,
                grid=grid,
                in_specs=[x_spec, w_spec, brow_spec],
                out_specs=out_spec,
                scratch_shapes=[pltpu.VMEM((TM, TN), jnp.float32)]),
            compiler_params=cparams,
            cost_estimate=pl.CostEstimate(flops=flops, transcendentals=0,
                                          bytes_accessed=bytes_accessed),
        )(xp, wmu, bmu)

    return out_p[:B, :out_f]


# ----------------------- parameter / noise init ----------------------------- #

def init_noisy_linear_params(key, in_features: int, out_features: int,
                             std_init: float = 0.5):
    """Deterministic re-implementation of reset_parameters() + reset_noise().

    Returns the factorized noise vectors (eps_in, eps_out); weight_epsilon and
    bias_epsilon are derived inside the kernel (weight) / wrapper (bias).
    """
    k_wmu, k_bmu, k_ein, k_eout = jax.random.split(key, 4)
    mu_range = 1.0 / jnp.sqrt(jnp.float32(in_features))

    weight_mu = jax.random.uniform(
        k_wmu, (out_features, in_features), jnp.float32,
        minval=-mu_range, maxval=mu_range)
    weight_sigma = jnp.full((out_features, in_features),
                            std_init / jnp.sqrt(jnp.float32(in_features)),
                            jnp.float32)
    bias_mu = jax.random.uniform(
        k_bmu, (out_features,), jnp.float32, minval=-mu_range, maxval=mu_range)
    bias_sigma = jnp.full((out_features,),
                          std_init / jnp.sqrt(jnp.float32(out_features)),
                          jnp.float32)

    def scale_noise(k, size):
        z = jax.random.normal(k, (size,), jnp.float32)
        return jnp.sign(z) * jnp.sqrt(jnp.abs(z))

    eps_in = scale_noise(k_ein, in_features)
    eps_out = scale_noise(k_eout, out_features)

    return dict(weight_mu=weight_mu, weight_sigma=weight_sigma,
                bias_mu=bias_mu, bias_sigma=bias_sigma,
                eps_in=eps_in, eps_out=eps_out)


# --------------------------------- demo ------------------------------------- #

if __name__ == "__main__":
    key = jax.random.PRNGKey(0)

    # (batch, in_features, out_features, tk): one tiny single-tile case, plus a
    # modest case that exercises the K-reduction grid axis (Kp // TK == 2).
    for (batch, in_f, out_f, tk) in [(8, 32, 64, 512), (16, 512, 256, 256)]:
        key, k_params, k_x = jax.random.split(key, 3)
        params = init_noisy_linear_params(k_params, in_f, out_f, std_init=0.5)
        x = jax.random.normal(k_x, (batch, in_f), jnp.float32)

        # Training path (noisy weights).
        out = jax.block_until_ready(noisy_linear_forward(
            x,
            params["weight_mu"], params["weight_sigma"],
            params["eps_in"], params["eps_out"],
            params["bias_mu"], params["bias_sigma"],
            training=True, tk=tk))

        w_eps = jnp.outer(params["eps_out"], params["eps_in"])
        w_eff = params["weight_mu"] + params["weight_sigma"] * w_eps
        b_eff = params["bias_mu"] + params["bias_sigma"] * params["eps_out"]
        ref = jnp.dot(x, w_eff.T, precision=lax.Precision.HIGHEST) + b_eff
        assert out.shape == (batch, out_f)
        assert jnp.allclose(out, ref, atol=2e-4, rtol=2e-4), \
            f"train mismatch at shape {(batch, in_f, out_f)}"

        # Eval path (plain F.linear with mu params; sigma/eps never loaded).
        out_eval = jax.block_until_ready(noisy_linear_forward(
            x,
            params["weight_mu"], params["weight_sigma"],
            params["eps_in"], params["eps_out"],
            params["bias_mu"], params["bias_sigma"],
            training=False, tk=tk))
        ref_eval = (jnp.dot(x, params["weight_mu"].T,
                            precision=lax.Precision.HIGHEST)
                    + params["bias_mu"])
        assert jnp.allclose(out_eval, ref_eval, atol=2e-4, rtol=2e-4), \
            f"eval mismatch at shape {(batch, in_f, out_f)}"

    print("KERNEL_OK")
</pallas_src>

<mosaic_0001>
module attributes {stable_mosaic.version = 11 : i64} {
  func.func @_noisy_linear_train_kernel(%arg0: i32, %arg1: i32, %arg2: i32, %arg3: memref<8x128xf32, #tpu.memory_space<vmem>>, %arg4: memref<128x128xf32, #tpu.memory_space<vmem>>, %arg5: memref<128x128xf32, #tpu.memory_space<vmem>>, %arg6: memref<128x1xf32, #tpu.memory_space<vmem>>, %arg7: memref<1x128xf32, #tpu.memory_space<vmem>>, %arg8: memref<1x128xf32, #tpu.memory_space<vmem>>, %arg9: memref<1x128xf32, #tpu.memory_space<vmem>>, %arg10: memref<1x128xf32, #tpu.memory_space<vmem>>, %arg11: memref<8x128xf32, #tpu.memory_space<vmem>>, %arg12: memref<8x128xf32, #tpu.memory_space<vmem>>) attributes {dimension_semantics = [#tpu.dimension_semantics<parallel>, #tpu.dimension_semantics<parallel>, #tpu.dimension_semantics<arbitrary>], iteration_bounds = array<i64: 1, 1, 1>, scalar_prefetch = 0 : i64, scratch_operands = 1 : i64, tpu.core_type = #tpu.core_type<tc>, window_params = [{transform_indices = @transform_0, window_bounds = array<i64: 8, 128>}, {transform_indices = @transform_1, window_bounds = array<i64: 128, 128>}, {transform_indices = @transform_2, window_bounds = array<i64: 128, 128>}, {transform_indices = @transform_3, window_bounds = array<i64: 128, 1>}, {transform_indices = @transform_4, window_bounds = array<i64: 1, 128>}, {transform_indices = @transform_5, window_bounds = array<i64: 1, 128>}, {transform_indices = @transform_6, window_bounds = array<i64: 1, 128>}, {transform_indices = @transform_7, window_bounds = array<i64: 1, 128>}, {transform_indices = @transform_8, window_bounds = array<i64: 8, 128>}]} {
    %c0_i32 = arith.constant 0 : i32
    %0 = arith.cmpi eq, %arg2, %c0_i32 : i32
    %1 = arith.extui %0 : i1 to i32
    %c0_i32_0 = arith.constant 0 : i32
    %2 = arith.cmpi ne, %1, %c0_i32_0 : i32
    scf.if %2 {
      %cst_16 = arith.constant 0.000000e+00 : f32
      %20 = vector.broadcast %cst_16 : f32 to vector<8x128xf32>
      %c0_17 = arith.constant 0 : index
      %c0_18 = arith.constant 0 : index
      %21 = vector.load %arg12[%c0_17, %c0_18] : memref<8x128xf32, #tpu.memory_space<vmem>>, vector<8x128xf32>
      tpu.vector_store %arg12[%c0_17, %c0_18], %20 {strides = array<i32>} : memref<8x128xf32, #tpu.memory_space<vmem>>, vector<8x128xf32>,
    } else {
    }
    %c0 = arith.constant 0 : index
    %c0_1 = arith.constant 0 : index
    %3 = vector.load %arg4[%c0, %c0_1] : memref<128x128xf32, #tpu.memory_space<vmem>>, vector<128x128xf32>
    %c0_2 = arith.constant 0 : index
    %c0_3 = arith.constant 0 : index
    %4 = vector.load %arg5[%c0_2, %c0_3] : memref<128x128xf32, #tpu.memory_space<vmem>>, vector<128x128xf32>
    %c0_4 = arith.constant 0 : index
    %c0_5 = arith.constant 0 : index
    %5 = vector.load %arg6[%c0_4, %c0_5] : memref<128x1xf32, #tpu.memory_space<vmem>>, vector<128x1xf32>
    %c0_6 = arith.constant 0 : index
    %c0_7 = arith.constant 0 : index
    %6 = vector.load %arg7[%c0_6, %c0_7] : memref<1x128xf32, #tpu.memory_space<vmem>>, vector<1x128xf32>
    %7 = vector.broadcast %5 : vector<128x1xf32> to vector<128x128xf32>
    %8 = vector.broadcast %6 : vector<1x128xf32> to vector<128x128xf32>
    %9 = arith.mulf %7, %8 : vector<128x128xf32>
    %10 = arith.mulf %4, %9 : vector<128x128xf32>
    %11 = arith.addf %3, %10 : vector<128x128xf32>
    %c0_8 = arith.constant 0 : index
    %c0_9 = arith.constant 0 : index
    %12 = vector.load %arg12[%c0_8, %c0_9] : memref<8x128xf32, #tpu.memory_space<vmem>>, vector<8x128xf32>
    %c0_10 = arith.constant 0 : index
    %c0_11 = arith.constant 0 : index
    %13 = vector.load %arg3[%c0_10, %c0_11] : memref<8x128xf32, #tpu.memory_space<vmem>>, vector<8x128xf32>
    %cst = arith.constant dense<0.000000e+00> : vector<8x128xf32>
    %14 = tpu.matmul %13, %11, %cst {dimension_numbers = #tpu.dot_dimension_numbers<[1], [1], [0], [0], [0, 0, 1, 0], [], []>} : vector<8x128xf32>, vector<128x128xf32>, vector<8x128xf32> -> vector<8x128xf32>
    %15 = arith.addf %12, %14 : vector<8x128xf32>
    %c0_12 = arith.constant 0 : index
    %c0_13 = arith.constant 0 : index
    %16 = vector.load %arg12[%c0_12, %c0_13] : memref<8x128xf32, #tpu.memory_space<vmem>>, vector<8x128xf32>
    tpu.vector_store %arg12[%c0_12, %c0_13], %15 {strides = array<i32>} : memref<8x128xf32, #tpu.memory_space<vmem>>, vector<8x128xf32>,
    %c0_i32_14 = arith.constant 0 : i32
    %17 = arith.cmpi eq, %arg2, %c0_i32_14 : i32
    %18 = arith.extui %17 : i1 to i32
    %c0_i32_15 = arith.constant 0 : i32
    %19 = arith.cmpi ne, %18, %c0_i32_15 : i32
    scf.if %19 {
      %c0_16 = arith.constant 0 : index
      %c0_17 = arith.constant 0 : index
      %20 = vector.load %arg8[%c0_16, %c0_17] : memref<1x128xf32, #tpu.memory_space<vmem>>, vector<1x128xf32>
      %c0_18 = arith.constant 0 : index
      %c0_19 = arith.constant 0 : index
      %21 = vector.load %arg9[%c0_18, %c0_19] : memref<1x128xf32, #tpu.memory_space<vmem>>, vector<1x128xf32>
      %c0_20 = arith.constant 0 : index
      %c0_21 = arith.constant 0 : index
      %22 = vector.load %arg10[%c0_20, %c0_21] : memref<1x128xf32, #tpu.memory_space<vmem>>, vector<1x128xf32>
      %23 = arith.mulf %21, %22 : vector<1x128xf32>
      %24 = arith.addf %20, %23 : vector<1x128xf32>
      %c0_22 = arith.constant 0 : index
      %c0_23 = arith.constant 0 : index
      %25 = vector.load %arg12[%c0_22, %c0_23] : memref<8x128xf32, #tpu.memory_space<vmem>>, vector<8x128xf32>
      %26 = vector.broadcast %24 : vector<1x128xf32> to vector<8x128xf32>
      %27 = arith.addf %25, %26 : vector<8x128xf32>
      %c0_24 = arith.constant 0 : index
      %c0_25 = arith.constant 0 : index
      %28 = vector.load %arg11[%c0_24, %c0_25] : memref<8x128xf32, #tpu.memory_space<vmem>>, vector<8x128xf32>
      tpu.vector_store %arg11[%c0_24, %c0_25], %27 {strides = array<i32>} : memref<8x128xf32, #tpu.memory_space<vmem>>, vector<8x128xf32>,
    } else {
    }
    return
  }
  func.func @transform_0(%arg0: i32, %arg1: i32, %arg2: i32) -> (i32, i32) {
    %c0_i32 = arith.constant 0 : i32
    return %arg0, %arg2 : i32, i32
  }
  func.func @transform_1(%arg0: i32, %arg1: i32, %arg2: i32) -> (i32, i32) {
    %c0_i32 = arith.constant 0 : i32
    return %arg1, %arg2 : i32, i32
  }
  func.func @transform_2(%arg0: i32, %arg1: i32, %arg2: i32) -> (i32, i32) {
    %c0_i32 = arith.constant 0 : i32
    return %arg1, %arg2 : i32, i32
  }
  func.func @transform_3(%arg0: i32, %arg1: i32, %arg2: i32) -> (i32, i32) {
    %c0_i32 = arith.constant 0 : i32
    %c0_i32_0 = arith.constant 0 : i32
    return %arg1, %c0_i32 : i32, i32
  }
  func.func @transform_4(%arg0: i32, %arg1: i32, %arg2: i32) -> (i32, i32) {
    %c0_i32 = arith.constant 0 : i32
    %c0_i32_0 = arith.constant 0 : i32
    return %c0_i32, %arg2 : i32, i32
  }
  func.func @transform_5(%arg0: i32, %arg1: i32, %arg2: i32) -> (i32, i32) {
    %c0_i32 = arith.constant 0 : i32
    %c0_i32_0 = arith.constant 0 : i32
    return %c0_i32, %arg1 : i32, i32
  }
  func.func @transform_6(%arg0: i32, %arg1: i32, %arg2: i32) -> (i32, i32) {
    %c0_i32 = arith.constant 0 : i32
    %c0_i32_0 = arith.constant 0 : i32
    return %c0_i32, %arg1 : i32, i32
  }
  func.func @transform_7(%arg0: i32, %arg1: i32, %arg2: i32) -> (i32, i32) {
    %c0_i32 = arith.constant 0 : i32
    %c0_i32_0 = arith.constant 0 : i32
    return %c0_i32, %arg1 : i32, i32
  }
  func.func @transform_8(%arg0: i32, %arg1: i32, %arg2: i32) -> (i32, i32) {
    %c0_i32 = arith.constant 0 : i32
    return %arg0, %arg1 : i32, i32
  }
}

</mosaic_0001>

<llo_original>
// kernel: tpu_custom_call.1
$region0: #{tpu_custom_call.1}
  #allocation0 [shape = 'u32[]', space=smem, size = 0x4, offset = 0x4, fixed_abs, tag = 'smem constant byte address 0x4 - core index']
  #allocation1 [shape = 'u32[72,128]{1,0:T(1,128)}', space=vmem, size = 0x9000, scoped, tag = 'internal scratch']
  #allocation2 [shape = 'f32[8,128]{1,0:T(8,128)}', space=vmem, size = 0x1000, scoped, tag = 'scratch operand']
  %s0 = inlined_call_operand.hbm [shape: f32[8,128], index: 0, kind: input, shape index: {}]
  %s1 = inlined_call_operand.vmem [shape: f32[128,128], index: 1, kind: input, shape index: {}]
  %s2 = inlined_call_operand.hbm [shape: f32[128,128], index: 2, kind: input, shape index: {}]
  %s3 = inlined_call_operand.vmem [shape: f32[128,1], index: 3, kind: input, shape index: {}]
  %s4 = inlined_call_operand.vmem [shape: f32[1,128], index: 4, kind: input, shape index: {}]
  %s5 = inlined_call_operand.vmem [shape: f32[1,128], index: 5, kind: input, shape index: {}]
  %s6 = inlined_call_operand.vmem [shape: f32[1,128], index: 6, kind: input, shape index: {}]
  %s7 = inlined_call_operand.vmem [shape: f32[1,128], index: 7, kind: input, shape index: {}]
  %s8 = inlined_call_operand.hbm [shape: f32[8,128], index: 8, kind: output, shape index: {}]
  %s9 = sld [smem:[#allocation0]]
  $region58: #{tpu_custom_call.1} parent=0
    _
  %s11 = ssub.s32 1, %s9
  %s12 = scalar_select 0, %s11, %s9
  $region1: #{tpu_custom_call.1} parent=0
    #allocation3 [shape = 'u8[4096]{0}', space=vmem, size = 0x1000, scoped, tag = 'input window, operand 0, single buffered']
    #allocation4 [shape = 's32[1]{0}', space=sflag, size = 0x4, scoped, tag = 'scoped memory for tpu_custom_call.1']
    #allocation5 [shape = 's32[1]{0}', space=sflag, size = 0x4, scoped, tag = 'scoped memory for tpu_custom_call.1']
    #allocation6 [shape = 'u8[65536]{0}', space=vmem, size = 0x10000, scoped, tag = 'input window, operand 2, single buffered']
    #allocation7 [shape = 's32[1]{0}', space=sflag, size = 0x4, scoped, tag = 'scoped memory for tpu_custom_call.1']
    #allocation8 [shape = 'u8[4096]{0}', space=vmem, size = 0x1000, scoped, tag = 'output window, operand 0, single buffered']
    %13 = vsyncpa [#allocation4], 0
    %14 = vsyncpa [#allocation7], 0
    %15 = vsyncpa [#allocation5], 0
    // Predicated region
    $region2: #{tpu_custom_call.1} parent=1 // pred_check
      _
    $region3: #{tpu_custom_call.1} parent=1 // pred_check_branch
      %17 = sbr.rel (0) target = $region5
    $region4: #{tpu_custom_call.1} parent=1 // pred_region
      %19 = vsyncadd [#allocation4], 0
      %s21 = sshll.u32 %s0, 4
      %s22 = int_to_ptr.hbm [resolvable:$true] %s21
      %s23 = sshll.u32 [#allocation3], 4
      %s24 = int_to_ptr.vmem [resolvable:$true] %s23
      %26 = dma.hbm_to_vmem [thread:$0]  %s22, 128, %s24, [#allocation4]
    $region5: #{tpu_custom_call.1} parent=1 // pred_fallthru
      _
    // Predicated region
    $region6: #{tpu_custom_call.1} parent=1 // pred_check
      _
    $region7: #{tpu_custom_call.1} parent=1 // pred_check_branch
      %28 = sbr.rel (0) target = $region9
    $region8: #{tpu_custom_call.1} parent=1 // pred_region
      _
    $region9: #{tpu_custom_call.1} parent=1 // pred_fallthru
      _
    // Predicated region
    $region10: #{tpu_custom_call.1} parent=1 // pred_check
      _
    $region11: #{tpu_custom_call.1} parent=1 // pred_check_branch
      %30 = sbr.rel (0) target = $region13
    $region12: #{tpu_custom_call.1} parent=1 // pred_region
      %32 = vsyncadd [#allocation7], 0
      %s33 = sshll.u32 %s2, 4
      %s34 = int_to_ptr.hbm [resolvable:$true] %s33
      %s35 = sshll.u32 [#allocation6], 4
      %s36 = int_to_ptr.vmem [resolvable:$true] %s35
      %41 = dma.hbm_to_vmem [thread:$0]  %s34, 2048, %s36, [#allocation7], 128, 128, 8
    $region13: #{tpu_custom_call.1} parent=1 // pred_fallthru
      _
    // Predicated region
    $region14: #{tpu_custom_call.1} parent=1 // pred_check
      _
    $region15: #{tpu_custom_call.1} parent=1 // pred_check_branch
      %43 = sbr.rel (0) target = $region17
    $region16: #{tpu_custom_call.1} parent=1 // pred_region
      _
    $region17: #{tpu_custom_call.1} parent=1 // pred_fallthru
      _
    // Predicated region
    $region18: #{tpu_custom_call.1} parent=1 // pred_check
      _
    $region19: #{tpu_custom_call.1} parent=1 // pred_check_branch
      %45 = sbr.rel (0) target = $region21
    $region20: #{tpu_custom_call.1} parent=1 // pred_region
      _
    $region21: #{tpu_custom_call.1} parent=1 // pred_fallthru
      _
    // Predicated region
    $region22: #{tpu_custom_call.1} parent=1 // pred_check
      _
    $region23: #{tpu_custom_call.1} parent=1 // pred_check_branch
      %47 = sbr.rel (0) target = $region25
    $region24: #{tpu_custom_call.1} parent=1 // pred_region
      _
    $region25: #{tpu_custom_call.1} parent=1 // pred_fallthru
      _
    // Predicated region
    $region26: #{tpu_custom_call.1} parent=1 // pred_check
      _
    $region27: #{tpu_custom_call.1} parent=1 // pred_check_branch
      %49 = sbr.rel (0) target = $region29
    $region28: #{tpu_custom_call.1} parent=1 // pred_region
      _
    $region29: #{tpu_custom_call.1} parent=1 // pred_fallthru
      _
    // Predicated region
    $region30: #{tpu_custom_call.1} parent=1 // pred_check
      _
    $region31: #{tpu_custom_call.1} parent=1 // pred_check_branch
      %51 = sbr.rel (0) target = $region33
    $region32: #{tpu_custom_call.1} parent=1 // pred_region
      _
    $region33: #{tpu_custom_call.1} parent=1 // pred_fallthru
      _
    // Predicated region
    $region34: #{tpu_custom_call.1} parent=1 // pred_check
      _
    $region35: #{tpu_custom_call.1} parent=1 // pred_check_branch
      %53 = sbr.rel (0) target = $region37
    $region36: #{tpu_custom_call.1} parent=1 // pred_region
      %55 = dma.done [#allocation4], 128
    $region37: #{tpu_custom_call.1} parent=1 // pred_fallthru
      _
    // Predicated region
    $region38: #{tpu_custom_call.1} parent=1 // pred_check
      _
    $region39: #{tpu_custom_call.1} parent=1 // pred_check_branch
      %57 = sbr.rel (0) target = $region41
    $region40: #{tpu_custom_call.1} parent=1 // pred_region
      %59 = dma.done [#allocation7], 2048
    $region41: #{tpu_custom_call.1} parent=1 // pred_fallthru
      _
    %p60 = scmp.eq.s32.totalorder 0, 0
    // Predicated region
    $region42: #{tpu_custom_call.1} parent=1 // pred_check
      %p61 = pneg %p60
    $region43: #{tpu_custom_call.1} parent=1 // pred_check_branch
      %63 = sbr.rel (%p61) target = $region45
    $region44: #{tpu_custom_call.1} parent=1 // pred_region
      %64 = vst [vmem:[#allocation2] sm:$0xff] 0.0
    $region45: #{tpu_custom_call.1} parent=1 // pred_fallthru
      _
    %v65 = vld [vmem:[%s1] sm:$0xff]
    %v66 = vld [vmem:[%s1 + $0x8] sm:$0xff]
    %v67 = vld [vmem:[%s1 + $0x10] sm:$0xff]
    %v68 = vld [vmem:[%s1 + $0x18] sm:$0xff]
    %v69 = vld [vmem:[%s1 + $0x20] sm:$0xff]
    %v70 = vld [vmem:[%s1 + $0x28] sm:$0xff]
    %v71 = vld [vmem:[%s1 + $0x30] sm:$0xff]
    %v72 = vld [vmem:[%s1 + $0x38] sm:$0xff]
    %v73 = vld [vmem:[%s1 + $0x40] sm:$0xff]
    %v74 = vld [vmem:[%s1 + $0x48] sm:$0xff]
    %v75 = vld [vmem:[%s1 + $0x50] sm:$0xff]
    %v76 = vld [vmem:[%s1 + $0x58] sm:$0xff]
    %v77 = vld [vmem:[%s1 + $0x60] sm:$0xff]
    %v78 = vld [vmem:[%s1 + $0x68] sm:$0xff]
    %v79 = vld [vmem:[%s1 + $0x70] sm:$0xff]
    %v80 = vld [vmem:[%s1 + $0x78] sm:$0xff]
    %v81 = vld [vmem:[#allocation6] sm:$0xff]
    %v82 = vld [vmem:[#allocation6 + $0x8] sm:$0xff]
    %v83 = vld [vmem:[#allocation6 + $0x10] sm:$0xff]
    %v84 = vld [vmem:[#allocation6 + $0x18] sm:$0xff]
    %v85 = vld [vmem:[#allocation6 + $0x20] sm:$0xff]
    %v86 = vld [vmem:[#allocation6 + $0x28] sm:$0xff]
    %v87 = vld [vmem:[#allocation6 + $0x30] sm:$0xff]
    %v88 = vld [vmem:[#allocation6 + $0x38] sm:$0xff]
    %v89 = vld [vmem:[#allocation6 + $0x40] sm:$0xff]
    %v90 = vld [vmem:[#allocation6 + $0x48] sm:$0xff]
    %v91 = vld [vmem:[#allocation6 + $0x50] sm:$0xff]
    %v92 = vld [vmem:[#allocation6 + $0x58] sm:$0xff]
    %v93 = vld [vmem:[#allocation6 + $0x60] sm:$0xff]
    %v94 = vld [vmem:[#allocation6 + $0x68] sm:$0xff]
    %v95 = vld [vmem:[#allocation6 + $0x70] sm:$0xff]
    %v96 = vld [vmem:[#allocation6 + $0x78] sm:$0xff]
    %v97 = vld [vmem:[%s3] sm:$0xff]
    %v98 = vld [vmem:[%s3 + $0x8] sm:$0xff]
    %v99 = vld [vmem:[%s3 + $0x10] sm:$0xff]
    %v100 = vld [vmem:[%s3 + $0x18] sm:$0xff]
    %v101 = vld [vmem:[%s3 + $0x20] sm:$0xff]
    %v102 = vld [vmem:[%s3 + $0x28] sm:$0xff]
    %v103 = vld [vmem:[%s3 + $0x30] sm:$0xff]
    %v104 = vld [vmem:[%s3 + $0x38] sm:$0xff]
    %v105 = vld [vmem:[%s3 + $0x40] sm:$0xff]
    %v106 = vld [vmem:[%s3 + $0x48] sm:$0xff]
    %v107 = vld [vmem:[%s3 + $0x50] sm:$0xff]
    %v108 = vld [vmem:[%s3 + $0x58] sm:$0xff]
    %v109 = vld [vmem:[%s3 + $0x60] sm:$0xff]
    %v110 = vld [vmem:[%s3 + $0x68] sm:$0xff]
    %v111 = vld [vmem:[%s3 + $0x70] sm:$0xff]
    %v112 = vld [vmem:[%s3 + $0x78] sm:$0xff]
    %v113 = vld [vmem:[%s4] sm:$0x1]
    %115 = vset.pattern.permute.xlu0 0
    %116 = vperm.xlu0 %115, %v97
    %v117 = vpop.permute.xlu0 %116
    %120 = vset.pattern.permute.xlu0 0
    %121 = vperm.xlu0 %120, %v98
    %v122 = vpop.permute.xlu0 %121
    %125 = vset.pattern.permute.xlu0 0
    %126 = vperm.xlu0 %125, %v99
    %v127 = vpop.permute.xlu0 %126
    %130 = vset.pattern.permute.xlu0 0
    %131 = vperm.xlu0 %130, %v100
    %v132 = vpop.permute.xlu0 %131
    %135 = vset.pattern.permute.xlu0 0
    %136 = vperm.xlu0 %135, %v101
    %v137 = vpop.permute.xlu0 %136
    %140 = vset.pattern.permute.xlu0 0
    %141 = vperm.xlu0 %140, %v102
    %v142 = vpop.permute.xlu0 %141
    %145 = vset.pattern.permute.xlu0 0
    %146 = vperm.xlu0 %145, %v103
    %v147 = vpop.permute.xlu0 %146
    %150 = vset.pattern.permute.xlu0 0
    %151 = vperm.xlu0 %150, %v104
    %v152 = vpop.permute.xlu0 %151
    %155 = vset.pattern.permute.xlu0 0
    %156 = vperm.xlu0 %155, %v105
    %v157 = vpop.permute.xlu0 %156
    %160 = vset.pattern.permute.xlu0 0
    %161 = vperm.xlu0 %160, %v106
    %v162 = vpop.permute.xlu0 %161
    %165 = vset.pattern.permute.xlu0 0
    %166 = vperm.xlu0 %165, %v107
    %v167 = vpop.permute.xlu0 %166
    %170 = vset.pattern.permute.xlu0 0
    %171 = vperm.xlu0 %170, %v108
    %v172 = vpop.permute.xlu0 %171
    %175 = vset.pattern.permute.xlu0 0
    %176 = vperm.xlu0 %175, %v109
    %v177 = vpop.permute.xlu0 %176
    %180 = vset.pattern.permute.xlu0 0
    %181 = vperm.xlu0 %180, %v110
    %v182 = vpop.permute.xlu0 %181
    %185 = vset.pattern.permute.xlu0 0
    %186 = vperm.xlu0 %185, %v111
    %v187 = vpop.permute.xlu0 %186
    %190 = vset.pattern.permute.xlu0 0
    %191 = vperm.xlu0 %190, %v112
    %v192 = vpop.permute.xlu0 %191
    %v195 = vperm.slane %v113, 0
    %v197 = vmul.f32 %v117, %v195
    %v198 = vmul.f32 %v122, %v195
    %v199 = vmul.f32 %v127, %v195
    %v200 = vmul.f32 %v132, %v195
    %v201 = vmul.f32 %v137, %v195
    %v202 = vmul.f32 %v142, %v195
    %v203 = vmul.f32 %v147, %v195
    %v204 = vmul.f32 %v152, %v195
    %v205 = vmul.f32 %v157, %v195
    %v206 = vmul.f32 %v162, %v195
    %v207 = vmul.f32 %v167, %v195
    %v208 = vmul.f32 %v172, %v195
    %v209 = vmul.f32 %v177, %v195
    %v210 = vmul.f32 %v182, %v195
    %v211 = vmul.f32 %v187, %v195
    %v212 = vmul.f32 %v192, %v195
    %v213 = vmul.f32 %v81, %v197
    %v214 = vmul.f32 %v82, %v198
    %v215 = vmul.f32 %v83, %v199
    %v216 = vmul.f32 %v84, %v200
    %v217 = vmul.f32 %v85, %v201
    %v218 = vmul.f32 %v86, %v202
    %v219 = vmul.f32 %v87, %v203
    %v220 = vmul.f32 %v88, %v204
    %v221 = vmul.f32 %v89, %v205
    %v222 = vmul.f32 %v90, %v206
    %v223 = vmul.f32 %v91, %v207
    %v224 = vmul.f32 %v92, %v208
    %v225 = vmul.f32 %v93, %v209
    %v226 = vmul.f32 %v94, %v210
    %v227 = vmul.f32 %v95, %v211
    %v228 = vmul.f32 %v96, %v212
    %v229 = vadd.f32 %v65, %v213
    %v230 = vadd.f32 %v66, %v214
    %v231 = vadd.f32 %v67, %v215
    %v232 = vadd.f32 %v68, %v216
    %v233 = vadd.f32 %v69, %v217
    %v234 = vadd.f32 %v70, %v218
    %v235 = vadd.f32 %v71, %v219
    %v236 = vadd.f32 %v72, %v220
    %v237 = vadd.f32 %v73, %v221
    %v238 = vadd.f32 %v74, %v222
    %v239 = vadd.f32 %v75, %v223
    %v240 = vadd.f32 %v76, %v224
    %v241 = vadd.f32 %v77, %v225
    %v242 = vadd.f32 %v78, %v226
    %v243 = vadd.f32 %v79, %v227
    %v244 = vadd.f32 %v80, %v228
    %v245 = vld [vmem:[#allocation2] sm:$0xff]
    %v246 = vld [vmem:[#allocation3] sm:$0xff]
    %247 = vmatpush.xpose.msra.mxu0 %v244
    %248 = vmatpush.xpose.msra.mxu0 %v243
    %249 = vmatpush.xpose.msra.mxu0 %v242
    %250 = vmatpush.xpose.msra.mxu0 %v241
    %251 = vmatpush.xpose.msra.mxu0 %v240
    %252 = vmatpush.xpose.msra.mxu0 %v239
    %253 = vmatpush.xpose.msra.mxu0 %v238
    %254 = vmatpush.xpose.msra.mxu0 %v237
    %255 = vmatpush.xpose.msra.mxu0 %v236
    %256 = vmatpush.xpose.msra.mxu0 %v235
    %257 = vmatpush.xpose.msra.mxu0 %v234
    %258 = vmatpush.xpose.msra.mxu0 %v233
    %259 = vmatpush.xpose.msra.mxu0 %v232
    %260 = vmatpush.xpose.msra.mxu0 %v231
    %261 = vmatpush.xpose.msra.mxu0 %v230
    %262 = vmatpush.xpose.msra.mxu0 %v229
    %263 = vmatmul.f32.gmra.mxu0 %v246
    %v264 = vpop.f32.mrf.mxu0
    %v265 = vadd.f32 0.0, %v264
    %266 = vdwg.mxu0
    %v267 = vadd.f32 %v245, %v265
    %268 = vst [vmem:[#allocation2] sm:$0xff] %v267
    // Predicated region
    $region46: #{tpu_custom_call.1} parent=1 // pred_check
      %p269 = pneg %p60
    $region47: #{tpu_custom_call.1} parent=1 // pred_check_branch
      %271 = sbr.rel (%p269) target = $region49
    $region48: #{tpu_custom_call.1} parent=1 // pred_region
      %v272 = vld [vmem:[%s5] sm:$0x1]
      %v273 = vld [vmem:[%s6] sm:$0x1]
      %v274 = vld [vmem:[%s7] sm:$0x1]
      %v275 = vmul.f32 %v273, %v274
      %v276 = vadd.f32 %v272, %v275
      %v277 = vld [vmem:[#allocation2] sm:$0xff]
      %v279 = vperm.slane %v276, 0
      %v281 = vadd.f32 %v277, %v279
      %282 = vst [vmem:[#allocation8] sm:$0xff] %v281
    $region49: #{tpu_custom_call.1} parent=1 // pred_fallthru
      _
    // Predicated region
    $region50: #{tpu_custom_call.1} parent=1 // pred_check
      _
    $region51: #{tpu_custom_call.1} parent=1 // pred_check_branch
      %284 = sbr.rel (0) target = $region53
    $region52: #{tpu_custom_call.1} parent=1 // pred_region
      %286 = vsyncadd [#allocation5], 0
      %s288 = sshll.u32 [#allocation8], 4
      %s289 = int_to_ptr.vmem [resolvable:$true] %s288
      %s290 = sshll.u32 %s8, 4
      %s291 = int_to_ptr.hbm [resolvable:$true] %s290
      %293 = dma.vmem_to_hbm [thread:$0]  %s289, 128, %s291, [#allocation5]
    $region53: #{tpu_custom_call.1} parent=1 // pred_fallthru
      _
    // Predicated region
    $region54: #{tpu_custom_call.1} parent=1 // pred_check
      _
    $region55: #{tpu_custom_call.1} parent=1 // pred_check_branch
      %295 = sbr.rel (0) target = $region57
    $region56: #{tpu_custom_call.1} parent=1 // pred_region
      %297 = dma.done [#allocation5], 128
    $region57: #{tpu_custom_call.1} parent=1 // pred_fallthru
      _
    %298 = vsyncpa [#allocation4], 1
    %299 = vsyncpa [#allocation7], 1
    %300 = vsyncpa [#allocation5], 1

</llo_original>
